<compile_context>
chip_gen: v7x
topology: tpu7x:2x2x1
jax: 0.10.0
libtpu: 0.0.40
codegen_flags: <defaults>
</compile_context>

<pallas_src>
import jax
import jax.numpy as jnp
from jax.experimental import pallas as pl
from jax.experimental.pallas import tpu as pltpu


def _ceil_to(x: int, m: int) -> int:
    return ((x + m - 1) // m) * m


def _cdiv(a: int, b: int) -> int:
    return (a + b - 1) // b


def local_layer_kernel(x_ref, w_ref, b_ref, att_ref, exp_ref, seg_ref, pos_ref,
                       logits_ref, scores_ref, visual_ref):
    """One batch tile of the LocalLayer forward pass.

    Per grid step (all f32, lane-dense where it matters):
      x_ref      (TB, U)      input features
      w_ref      (U,  C)      fc weight (pre-transposed), VMEM-resident
      b_ref      (1,  C)      fc bias, VMEM-resident
      att_ref    (TB, C*L)    attention weights flattened to one lane row
      exp_ref    (C,  C*L)    indicator: class  -> its L lanes        (expand)
      seg_ref    (C*L, C)     indicator: lane   -> its class          (seg-sum)
      pos_ref    (C*L, L)     indicator: lane   -> position in class  (class mean)
    """
    x = x_ref[...]
    w = w_ref[...]
    b = b_ref[...]
    att = att_ref[...]
    expand = exp_ref[...]
    seg = seg_ref[...]
    pos = pos_ref[...]

    C = w.shape[1]

    # Linear layer on the MXU.
    logits = jnp.dot(x, w, preferred_element_type=jnp.float32) + b      # (TB, C)
    scores = jax.nn.sigmoid(logits)                                     # (TB, C)

    # Broadcast scores over each class's L lanes with a tiny MXU matmul,
    # keeping everything lane-dense (no (TB, C, 16) padded temporaries).
    scores_b = jnp.dot(scores, expand, preferred_element_type=jnp.float32)
    v = att * scores_b                                                  # (TB, C*L)

    # Per-class softmax over the L positions of each class segment.  One
    # per-row max is a valid shift: it is uniform within every class segment,
    # so the exp(max_c - max_row) factors cancel exactly in the ratio.
    m = jnp.max(v, axis=-1, keepdims=True)                              # (TB, 1)
    e = jnp.exp(v - m)                                                  # (TB, C*L)
    denom = jnp.dot(e, seg, preferred_element_type=jnp.float32)         # (TB, C)

    # Exact reciprocal (only TB*C elements); fold the class-mean 1/C in here.
    inv = 1.0 / (denom * jnp.float32(C))                                # (TB, C)
    inv_b = jnp.dot(inv, expand, preferred_element_type=jnp.float32)    # (TB, C*L)
    visual = jnp.dot(e * inv_b, pos, preferred_element_type=jnp.float32)  # (TB, L)

    logits_ref[...] = logits.astype(logits_ref.dtype)
    scores_ref[...] = scores.astype(scores_ref.dtype)
    visual_ref[...] = visual.astype(visual_ref.dtype)


def prepare_local_layer_params(weight, bias, att_len):
    """One-time parameter / constant preparation.

    weight: (C, U) torch nn.Linear layout; bias: (C,); att_len: L.
    Returns (w_t (U,C), b2d (1,C), expand (C,CL), seg (CL,C), pos (CL,L)).
    """
    C = weight.shape[0]
    L = att_len
    CL = C * L
    cls_of_lane = jnp.arange(CL, dtype=jnp.int32) // L
    pos_of_lane = jnp.arange(CL, dtype=jnp.int32) % L
    expand = (cls_of_lane[None, :] ==
              jnp.arange(C, dtype=jnp.int32)[:, None]).astype(jnp.float32)  # (C, CL)
    seg = jnp.transpose(expand)                                             # (CL, C)
    pos = (pos_of_lane[:, None] ==
           jnp.arange(L, dtype=jnp.int32)[None, :]).astype(jnp.float32)     # (CL, L)
    return weight.T, bias.reshape(1, -1), expand, seg, pos


def local_layer(x, att_weight, params, *, tb_max=1024):
    """x: (B, U); att_weight: (B, C, L); params from prepare_local_layer_params.

    tb_max / vmem_limit_bytes are conservative (safe on v5e/v6e/v7x); on
    v5e/v6e with the lane-dense layout tb_max can be raised to 2048-4096
    together with a larger vmem_limit_bytes to amortize per-step overhead.
    """
    w_t, b2d, expand, seg, pos = params
    B, U = x.shape
    C = w_t.shape[1]
    Ba, Ca, L = att_weight.shape
    assert Ba == B and Ca == C
    CL = C * L

    # Lane-dense att stream: free row-major reshape.
    att_flat = att_weight.reshape(B, CL)

    # Batch tile: multiple of 8 (f32 sublane).  Cap at tb_max, but also split
    # into >= 2 grid steps when possible so the "parallel" batch axis can be
    # sharded across both TensorCores on v7x.
    TB = max(8, min(_ceil_to(tb_max, 8), _ceil_to(_cdiv(B, 2), 8)))
    B_pad = _ceil_to(B, TB)
    if B_pad != B:
        x = jnp.pad(x, ((0, B_pad - B), (0, 0)))
        att_flat = jnp.pad(att_flat, ((0, B_pad - B), (0, 0)))

    grid = (B_pad // TB,)

    in_specs = [
        pl.BlockSpec((TB, U), lambda i: (i, 0)),     # x (U < 128; see TODO above)
        pl.BlockSpec((U, C), lambda i: (0, 0)),      # W^T: VMEM-resident
        pl.BlockSpec((1, C), lambda i: (0, 0)),      # bias: VMEM-resident
        pl.BlockSpec((TB, CL), lambda i: (i, 0)),    # att: lane-dense, batch-tiled
        pl.BlockSpec((C, CL), lambda i: (0, 0)),     # expand indicator, resident
        pl.BlockSpec((CL, C), lambda i: (0, 0)),     # segment-sum indicator, resident
        pl.BlockSpec((CL, L), lambda i: (0, 0)),     # class-mean indicator, resident
    ]
    out_specs = (
        pl.BlockSpec((TB, C), lambda i: (i, 0)),     # logits
        pl.BlockSpec((TB, C), lambda i: (i, 0)),     # scores
        pl.BlockSpec((TB, L), lambda i: (i, 0)),     # visual
    )
    out_shape = (
        jax.ShapeDtypeStruct((B_pad, C), jnp.float32),
        jax.ShapeDtypeStruct((B_pad, C), jnp.float32),
        jax.ShapeDtypeStruct((B_pad, L), jnp.float32),
    )

    cost = pl.CostEstimate(
        flops=int(2 * B_pad * (U * C + 3 * C * CL + CL * L) + 8 * B_pad * CL),
        transcendentals=int(B_pad * (CL + C)),
        bytes_accessed=int(4 * (B_pad * (U + CL + 2 * C + L)
                                + U * C + C + 2 * C * CL + CL * L)),
    )

    logits, scores, visual = pl.pallas_call(
        local_layer_kernel,
        out_shape=out_shape,
        grid=grid,
        in_specs=in_specs,
        out_specs=out_specs,
        compiler_params=pltpu.CompilerParams(
            dimension_semantics=("parallel",),       # megacore sharding on v7x
            vmem_limit_bytes=32 * 1024 * 1024,       # safe on v5e/v6e/v7x
        ),
        cost_estimate=cost,
    )(x, w_t, b2d, att_flat, expand, seg, pos)

    if B_pad != B:
        logits, scores, visual = logits[:B], scores[:B], visual[:B]
    return logits, scores, visual


def local_layer_ref(x, att_weight, weight, bias):
    logits = x @ weight.T + bias
    scores = jax.nn.sigmoid(logits)
    v = att_weight * scores[:, :, None]
    v = jax.nn.softmax(v, axis=-1)
    visual = jnp.mean(v, axis=1)
    return logits, scores, visual


def _check(B, U, C, L, key, tb_max):
    kx, ka, kw, kb = jax.random.split(key, 4)
    x = jax.random.normal(kx, (B, U), dtype=jnp.float32)
    att_weight = jax.random.uniform(ka, (B, C, L), dtype=jnp.float32)

    # Deterministic nn.Linear-style init: U(-1/sqrt(U), 1/sqrt(U)).
    bound = 1.0 / (U ** 0.5)
    weight = jax.random.uniform(kw, (C, U), dtype=jnp.float32,
                                minval=-bound, maxval=bound)
    bias = jax.random.uniform(kb, (C,), dtype=jnp.float32,
                              minval=-bound, maxval=bound)

    params = prepare_local_layer_params(weight, bias, L)
    logits, scores, visual = local_layer(x, att_weight, params, tb_max=tb_max)
    jax.block_until_ready((logits, scores, visual))

    r_logits, r_scores, r_visual = local_layer_ref(x, att_weight, weight, bias)
    assert logits.shape == r_logits.shape
    assert scores.shape == r_scores.shape
    assert visual.shape == r_visual.shape
    assert jnp.allclose(logits, r_logits, atol=1e-5, rtol=1e-5)
    assert jnp.allclose(scores, r_scores, atol=1e-5, rtol=1e-5)
    assert jnp.allclose(visual, r_visual, atol=1e-5, rtol=1e-4)


if __name__ == "__main__":
    key = jax.random.PRNGKey(0)
    k1, k2 = jax.random.split(key)

    # Module-consistent small shapes: batch=2, num_units=32, num_classes=8,
    # attention length 16 (so C*L = 128 = one full lane row).
    _check(B=2, U=32, C=8, L=16, key=k1, tb_max=1024)

    # Multi-step grid + batch-padding path (B=40 -> TB=16, grid=(3,)).
    _check(B=40, U=32, C=8, L=16, key=k2, tb_max=16)

    print("KERNEL_OK")
</pallas_src>

<mosaic_0001>
module attributes {stable_mosaic.version = 11 : i64} {
  func.func @local_layer_kernel(%arg0: i32, %arg1: memref<8x32xf32, #tpu.memory_space<vmem>>, %arg2: memref<32x8xf32, #tpu.memory_space<vmem>>, %arg3: memref<1x8xf32, #tpu.memory_space<vmem>>, %arg4: memref<8x128xf32, #tpu.memory_space<vmem>>, %arg5: memref<8x128xf32, #tpu.memory_space<vmem>>, %arg6: memref<128x8xf32, #tpu.memory_space<vmem>>, %arg7: memref<128x16xf32, #tpu.memory_space<vmem>>, %arg8: memref<8x8xf32, #tpu.memory_space<vmem>>, %arg9: memref<8x8xf32, #tpu.memory_space<vmem>>, %arg10: memref<8x16xf32, #tpu.memory_space<vmem>>) attributes {dimension_semantics = [#tpu.dimension_semantics<parallel>], iteration_bounds = array<i64: 1>, scalar_prefetch = 0 : i64, scratch_operands = 0 : i64, tpu.core_type = #tpu.core_type<tc>, window_params = [{transform_indices = @transform_0, window_bounds = array<i64: 8, 32>}, {pipeline_mode = #tpu.pipeline_mode<synchronous>, transform_indices = @transform_1, window_bounds = array<i64: 32, 8>}, {pipeline_mode = #tpu.pipeline_mode<synchronous>, transform_indices = @transform_2, window_bounds = array<i64: 1, 8>}, {transform_indices = @transform_3, window_bounds = array<i64: 8, 128>}, {pipeline_mode = #tpu.pipeline_mode<synchronous>, transform_indices = @transform_4, window_bounds = array<i64: 8, 128>}, {pipeline_mode = #tpu.pipeline_mode<synchronous>, transform_indices = @transform_5, window_bounds = array<i64: 128, 8>}, {pipeline_mode = #tpu.pipeline_mode<synchronous>, transform_indices = @transform_6, window_bounds = array<i64: 128, 16>}, {transform_indices = @transform_7, window_bounds = array<i64: 8, 8>}, {transform_indices = @transform_8, window_bounds = array<i64: 8, 8>}, {transform_indices = @transform_9, window_bounds = array<i64: 8, 16>}]} {
    %c0 = arith.constant 0 : index
    %c0_0 = arith.constant 0 : index
    %0 = vector.load %arg1[%c0, %c0_0] : memref<8x32xf32, #tpu.memory_space<vmem>>, vector<8x32xf32>
    %c0_1 = arith.constant 0 : index
    %c0_2 = arith.constant 0 : index
    %1 = vector.load %arg2[%c0_1, %c0_2] : memref<32x8xf32, #tpu.memory_space<vmem>>, vector<32x8xf32>
    %c0_3 = arith.constant 0 : index
    %c0_4 = arith.constant 0 : index
    %2 = vector.load %arg3[%c0_3, %c0_4] : memref<1x8xf32, #tpu.memory_space<vmem>>, vector<1x8xf32>
    %c0_5 = arith.constant 0 : index
    %c0_6 = arith.constant 0 : index
    %3 = vector.load %arg4[%c0_5, %c0_6] : memref<8x128xf32, #tpu.memory_space<vmem>>, vector<8x128xf32>
    %c0_7 = arith.constant 0 : index
    %c0_8 = arith.constant 0 : index
    %4 = vector.load %arg5[%c0_7, %c0_8] : memref<8x128xf32, #tpu.memory_space<vmem>>, vector<8x128xf32>
    %c0_9 = arith.constant 0 : index
    %c0_10 = arith.constant 0 : index
    %5 = vector.load %arg6[%c0_9, %c0_10] : memref<128x8xf32, #tpu.memory_space<vmem>>, vector<128x8xf32>
    %c0_11 = arith.constant 0 : index
    %c0_12 = arith.constant 0 : index
    %6 = vector.load %arg7[%c0_11, %c0_12] : memref<128x16xf32, #tpu.memory_space<vmem>>, vector<128x16xf32>
    %cst = arith.constant dense<0.000000e+00> : vector<8x8xf32>
    %7 = tpu.matmul %0, %1, %cst {dimension_numbers = #tpu.dot_dimension_numbers<[1], [0], [0], [1], [0, 0, 1, 1], [], []>} : vector<8x32xf32>, vector<32x8xf32>, vector<8x8xf32> -> vector<8x8xf32>
    %8 = vector.broadcast %2 : vector<1x8xf32> to vector<8x8xf32>
    %9 = arith.addf %7, %8 : vector<8x8xf32>
    %10 = arith.negf %9 : vector<8x8xf32>
    %11 = math.exp %10 : vector<8x8xf32>
    %cst_13 = arith.constant 1.000000e+00 : f32
    %12 = vector.broadcast %cst_13 : f32 to vector<8x8xf32>
    %13 = arith.addf %12, %11 : vector<8x8xf32>
    %14 = arith.divf %12, %13 : vector<8x8xf32>
    %cst_14 = arith.constant dense<0.000000e+00> : vector<8x128xf32>
    %15 = tpu.matmul %14, %4, %cst_14 {dimension_numbers = #tpu.dot_dimension_numbers<[1], [0], [0], [1], [0, 0, 1, 1], [], []>} : vector<8x8xf32>, vector<8x128xf32>, vector<8x128xf32> -> vector<8x128xf32>
    %16 = arith.mulf %3, %15 : vector<8x128xf32>
    %cst_15 = arith.constant dense<0xFF800000> : vector<8xf32>
    %17 = vector.multi_reduction <maximumf>, %16, %cst_15 [1] : vector<8x128xf32> to vector<8xf32>
    %18 = vector.shape_cast %17 : vector<8xf32> to vector<8x1xf32>
    %19 = vector.broadcast %18 : vector<8x1xf32> to vector<8x128xf32>
    %20 = arith.subf %16, %19 : vector<8x128xf32>
    %21 = math.exp %20 : vector<8x128xf32>
    %cst_16 = arith.constant dense<0.000000e+00> : vector<8x8xf32>
    %22 = tpu.matmul %21, %5, %cst_16 {dimension_numbers = #tpu.dot_dimension_numbers<[1], [0], [0], [1], [0, 0, 1, 1], [], []>} : vector<8x128xf32>, vector<128x8xf32>, vector<8x8xf32> -> vector<8x8xf32>
    %cst_17 = arith.constant 8.000000e+00 : f32
    %23 = vector.broadcast %cst_17 : f32 to vector<8x8xf32>
    %24 = arith.mulf %22, %23 : vector<8x8xf32>
    %cst_18 = arith.constant 1.000000e+00 : f32
    %25 = vector.broadcast %cst_18 : f32 to vector<8x8xf32>
    %26 = arith.divf %25, %24 : vector<8x8xf32>
    %cst_19 = arith.constant dense<0.000000e+00> : vector<8x128xf32>
    %27 = tpu.matmul %26, %4, %cst_19 {dimension_numbers = #tpu.dot_dimension_numbers<[1], [0], [0], [1], [0, 0, 1, 1], [], []>} : vector<8x8xf32>, vector<8x128xf32>, vector<8x128xf32> -> vector<8x128xf32>
    %28 = arith.mulf %21, %27 : vector<8x128xf32>
    %cst_20 = arith.constant dense<0.000000e+00> : vector<8x16xf32>
    %29 = tpu.matmul %28, %6, %cst_20 {dimension_numbers = #tpu.dot_dimension_numbers<[1], [0], [0], [1], [0, 0, 1, 1], [], []>} : vector<8x128xf32>, vector<128x16xf32>, vector<8x16xf32> -> vector<8x16xf32>
    %c0_21 = arith.constant 0 : index
    %c0_22 = arith.constant 0 : index
    %30 = vector.load %arg8[%c0_21, %c0_22] : memref<8x8xf32, #tpu.memory_space<vmem>>, vector<8x8xf32>
    tpu.vector_store %arg8[%c0_21, %c0_22], %9 {strides = array<i32>} : memref<8x8xf32, #tpu.memory_space<vmem>>, vector<8x8xf32>,
    %c0_23 = arith.constant 0 : index
    %c0_24 = arith.constant 0 : index
    %31 = vector.load %arg9[%c0_23, %c0_24] : memref<8x8xf32, #tpu.memory_space<vmem>>, vector<8x8xf32>
    tpu.vector_store %arg9[%c0_23, %c0_24], %14 {strides = array<i32>} : memref<8x8xf32, #tpu.memory_space<vmem>>, vector<8x8xf32>,
    %c0_25 = arith.constant 0 : index
    %c0_26 = arith.constant 0 : index
    %32 = vector.load %arg10[%c0_25, %c0_26] : memref<8x16xf32, #tpu.memory_space<vmem>>, vector<8x16xf32>
    tpu.vector_store %arg10[%c0_25, %c0_26], %29 {strides = array<i32>} : memref<8x16xf32, #tpu.memory_space<vmem>>, vector<8x16xf32>,
    return
  }
  func.func @transform_0(%arg0: i32) -> (i32, i32) {
    %c0_i32 = arith.constant 0 : i32
    %c0_i32_0 = arith.constant 0 : i32
    return %arg0, %c0_i32 : i32, i32
  }
  func.func @transform_1(%arg0: i32) -> (i32, i32) {
    %c0_i32 = arith.constant 0 : i32
    %c0_i32_0 = arith.constant 0 : i32
    %c0_i32_1 = arith.constant 0 : i32
    return %c0_i32, %c0_i32_0 : i32, i32
  }
  func.func @transform_2(%arg0: i32) -> (i32, i32) {
    %c0_i32 = arith.constant 0 : i32
    %c0_i32_0 = arith.constant 0 : i32
    %c0_i32_1 = arith.constant 0 : i32
    return %c0_i32, %c0_i32_0 : i32, i32
  }
  func.func @transform_3(%arg0: i32) -> (i32, i32) {
    %c0_i32 = arith.constant 0 : i32
    %c0_i32_0 = arith.constant 0 : i32
    return %arg0, %c0_i32 : i32, i32
  }
  func.func @transform_4(%arg0: i32) -> (i32, i32) {
    %c0_i32 = arith.constant 0 : i32
    %c0_i32_0 = arith.constant 0 : i32
    %c0_i32_1 = arith.constant 0 : i32
    return %c0_i32, %c0_i32_0 : i32, i32
  }
  func.func @transform_5(%arg0: i32) -> (i32, i32) {
    %c0_i32 = arith.constant 0 : i32
    %c0_i32_0 = arith.constant 0 : i32
    %c0_i32_1 = arith.constant 0 : i32
    return %c0_i32, %c0_i32_0 : i32, i32
  }
  func.func @transform_6(%arg0: i32) -> (i32, i32) {
    %c0_i32 = arith.constant 0 : i32
    %c0_i32_0 = arith.constant 0 : i32
    %c0_i32_1 = arith.constant 0 : i32
    return %c0_i32, %c0_i32_0 : i32, i32
  }
  func.func @transform_7(%arg0: i32) -> (i32, i32) {
    %c0_i32 = arith.constant 0 : i32
    %c0_i32_0 = arith.constant 0 : i32
    return %arg0, %c0_i32 : i32, i32
  }
  func.func @transform_8(%arg0: i32) -> (i32, i32) {
    %c0_i32 = arith.constant 0 : i32
    %c0_i32_0 = arith.constant 0 : i32
    return %arg0, %c0_i32 : i32, i32
  }
  func.func @transform_9(%arg0: i32) -> (i32, i32) {
    %c0_i32 = arith.constant 0 : i32
    %c0_i32_0 = arith.constant 0 : i32
    return %arg0, %c0_i32 : i32, i32
  }
}

</mosaic_0001>

<llo_original>
// kernel: tpu_custom_call.1
$region0: #{tpu_custom_call.1}
  #allocation0 [shape = 'u32[]', space=smem, size = 0x4, offset = 0x4, fixed_abs, tag = 'smem constant byte address 0x4 - core index']
  #allocation1 [shape = 'u32[144,128]{1,0:T(1,128)}', space=vmem, size = 0x12000, scoped, tag = 'internal scratch']
  %s0 = inlined_call_operand.vmem [shape: f32[8,32], index: 0, kind: input, shape index: {}]
  %s1 = inlined_call_operand.vmem [shape: f32[32,8], index: 1, kind: input, shape index: {}]
  %s2 = inlined_call_operand.vmem [shape: f32[1,8], index: 2, kind: input, shape index: {}]
  %s3 = inlined_call_operand.vmem [shape: f32[8,128], index: 3, kind: input, shape index: {}]
  %s4 = inlined_call_operand.vmem [shape: f32[8,128], index: 4, kind: input, shape index: {}]
  %s5 = inlined_call_operand.vmem [shape: f32[128,8], index: 5, kind: input, shape index: {}]
  %s6 = inlined_call_operand.vmem [shape: f32[128,16], index: 6, kind: input, shape index: {}]
  %s7 = inlined_call_operand.hbm [shape: f32[8,8], index: 7, kind: output, shape index: {0}]
  %s8 = inlined_call_operand.hbm [shape: f32[8,8], index: 8, kind: output, shape index: {1}]
  %s9 = inlined_call_operand.hbm [shape: f32[8,16], index: 9, kind: output, shape index: {2}]
  %10 = xla_tuple %s7, %s8, %s9
  %s11 = sld [smem:[#allocation0]]
  $region54: #{tpu_custom_call.1} parent=0
    _
  %s13 = ssub.s32 1, %s11
  %s14 = scalar_select 0, %s13, %s11
  $region1: #{tpu_custom_call.1} parent=0
    #allocation2 [shape = 'u8[4096]{0}', space=vmem, size = 0x1000, scoped, tag = 'output window, operand 0, single buffered']
    #allocation3 [shape = 's32[1]{0}', space=sflag, size = 0x4, scoped, tag = 'scoped memory for tpu_custom_call.1']
    #allocation4 [shape = 'u8[4096]{0}', space=vmem, size = 0x1000, scoped, tag = 'output window, operand 1, single buffered']
    #allocation5 [shape = 's32[1]{0}', space=sflag, size = 0x4, scoped, tag = 'scoped memory for tpu_custom_call.1']
    #allocation6 [shape = 'u8[4096]{0}', space=vmem, size = 0x1000, scoped, tag = 'output window, operand 2, single buffered']
    %15 = vsyncpa [#allocation3], 0
    %16 = vsyncpa [#allocation5], 0
    // Predicated region
    $region2: #{tpu_custom_call.1} parent=1 // pred_check
      _
    $region3: #{tpu_custom_call.1} parent=1 // pred_check_branch
      %18 = sbr.rel (0) target = $region5
    $region4: #{tpu_custom_call.1} parent=1 // pred_region
      _
    $region5: #{tpu_custom_call.1} parent=1 // pred_fallthru
      _
    // Predicated region
    $region6: #{tpu_custom_call.1} parent=1 // pred_check
      _
    $region7: #{tpu_custom_call.1} parent=1 // pred_check_branch
      %20 = sbr.rel (0) target = $region9
    $region8: #{tpu_custom_call.1} parent=1 // pred_region
      _
    $region9: #{tpu_custom_call.1} parent=1 // pred_fallthru
      _
    // Predicated region
    $region10: #{tpu_custom_call.1} parent=1 // pred_check
      _
    $region11: #{tpu_custom_call.1} parent=1 // pred_check_branch
      %22 = sbr.rel (0) target = $region13
    $region12: #{tpu_custom_call.1} parent=1 // pred_region
      _
    $region13: #{tpu_custom_call.1} parent=1 // pred_fallthru
      _
    // Predicated region
    $region14: #{tpu_custom_call.1} parent=1 // pred_check
      _
    $region15: #{tpu_custom_call.1} parent=1 // pred_check_branch
      %24 = sbr.rel (0) target = $region17
    $region16: #{tpu_custom_call.1} parent=1 // pred_region
      _
    $region17: #{tpu_custom_call.1} parent=1 // pred_fallthru
      _
    // Predicated region
    $region18: #{tpu_custom_call.1} parent=1 // pred_check
      _
    $region19: #{tpu_custom_call.1} parent=1 // pred_check_branch
      %26 = sbr.rel (0) target = $region21
    $region20: #{tpu_custom_call.1} parent=1 // pred_region
      _
    $region21: #{tpu_custom_call.1} parent=1 // pred_fallthru
      _
    // Predicated region
    $region22: #{tpu_custom_call.1} parent=1 // pred_check
      _
    $region23: #{tpu_custom_call.1} parent=1 // pred_check_branch
      %28 = sbr.rel (0) target = $region25
    $region24: #{tpu_custom_call.1} parent=1 // pred_region
      _
    $region25: #{tpu_custom_call.1} parent=1 // pred_fallthru
      _
    // Predicated region
    $region26: #{tpu_custom_call.1} parent=1 // pred_check
      _
    $region27: #{tpu_custom_call.1} parent=1 // pred_check_branch
      %30 = sbr.rel (0) target = $region29
    $region28: #{tpu_custom_call.1} parent=1 // pred_region
      _
    $region29: #{tpu_custom_call.1} parent=1 // pred_fallthru
      _
    %v31 = vld [vmem:[%s0] sm:$0xff]
    %v32 = vld [vmem:[%s1] sm:$0xff]
    %v33 = vld [vmem:[%s1 + $0x8] sm:$0xff]
    %v34 = vld [vmem:[%s1 + $0x10] sm:$0xff]
    %v35 = vld [vmem:[%s1 + $0x18] sm:$0xff]
    %v36 = vld [vmem:[%s2] sm:$0x1]
    %v37 = vld [vmem:[%s3] sm:$0xff]
    %v38 = vld [vmem:[%s4] sm:$0xff]
    %v39 = vld [vmem:[%s5] sm:$0xff]
    %v40 = vld [vmem:[%s5 + $0x8] sm:$0xff]
    %v41 = vld [vmem:[%s5 + $0x10] sm:$0xff]
    %v42 = vld [vmem:[%s5 + $0x18] sm:$0xff]
    %v43 = vld [vmem:[%s5 + $0x20] sm:$0xff]
    %v44 = vld [vmem:[%s5 + $0x28] sm:$0xff]
    %v45 = vld [vmem:[%s5 + $0x30] sm:$0xff]
    %v46 = vld [vmem:[%s5 + $0x38] sm:$0xff]
    %v47 = vld [vmem:[%s5 + $0x40] sm:$0xff]
    %v48 = vld [vmem:[%s5 + $0x48] sm:$0xff]
    %v49 = vld [vmem:[%s5 + $0x50] sm:$0xff]
    %v50 = vld [vmem:[%s5 + $0x58] sm:$0xff]
    %v51 = vld [vmem:[%s5 + $0x60] sm:$0xff]
    %v52 = vld [vmem:[%s5 + $0x68] sm:$0xff]
    %v53 = vld [vmem:[%s5 + $0x70] sm:$0xff]
    %v54 = vld [vmem:[%s5 + $0x78] sm:$0xff]
    %v55 = vld [vmem:[%s6] sm:$0xff]
    %v56 = vld [vmem:[%s6 + $0x8] sm:$0xff]
    %v57 = vld [vmem:[%s6 + $0x10] sm:$0xff]
    %v58 = vld [vmem:[%s6 + $0x18] sm:$0xff]
    %v59 = vld [vmem:[%s6 + $0x20] sm:$0xff]
    %v60 = vld [vmem:[%s6 + $0x28] sm:$0xff]
    %v61 = vld [vmem:[%s6 + $0x30] sm:$0xff]
    %v62 = vld [vmem:[%s6 + $0x38] sm:$0xff]
    %v63 = vld [vmem:[%s6 + $0x40] sm:$0xff]
    %v64 = vld [vmem:[%s6 + $0x48] sm:$0xff]
    %v65 = vld [vmem:[%s6 + $0x50] sm:$0xff]
    %v66 = vld [vmem:[%s6 + $0x58] sm:$0xff]
    %v67 = vld [vmem:[%s6 + $0x60] sm:$0xff]
    %v68 = vld [vmem:[%s6 + $0x68] sm:$0xff]
    %v69 = vld [vmem:[%s6 + $0x70] sm:$0xff]
    %v70 = vld [vmem:[%s6 + $0x78] sm:$0xff]
    %v72 = vlaneseq
    %v73 = vshrl.u32 %v72, 7
    %v74 = vsub.s32 0, %v73
    %v75 = vrot.slane %v36, %v74
    %vm77 = vcmask 261120
    %v79 = vsel %vm77, %v31, 0
    %81 = vmatprep.subr.mxu0 0.0
    %82 = vmatpush1.msra.mxu0 %v32
    %83 = vmatprep.subr.mxu0 0.0
    %84 = vmatpush1.msra.mxu0 %v33
    %85 = vmatprep.subr.mxu0 0.0
    %86 = vmatpush1.msra.mxu0 %v34
    %87 = vmatprep.subr.mxu0 0.0
    %88 = vmatpush1.msra.mxu0 %v35
    %89 = vmatprep.subr.mxu0 0.0
    %90 = vmatpush1.msra.mxu0 0.0
    %91 = vmatprep.subr.mxu0 0.0
    %92 = vmatpush1.msra.mxu0 0.0
    %93 = vmatprep.subr.mxu0 0.0
    %94 = vmatpush1.msra.mxu0 0.0
    %95 = vmatprep.subr.mxu0 0.0
    %96 = vmatpush1.msra.mxu0 0.0
    %97 = vmatprep.subr.mxu0 0.0
    %98 = vmatpush1.msra.mxu0 0.0
    %99 = vmatprep.subr.mxu0 0.0
    %100 = vmatpush1.msra.mxu0 0.0
    %101 = vmatprep.subr.mxu0 0.0
    %102 = vmatpush1.msra.mxu0 0.0
    %103 = vmatprep.subr.mxu0 0.0
    %104 = vmatpush1.msra.mxu0 0.0
    %105 = vmatprep.subr.mxu0 0.0
    %106 = vmatpush1.msra.mxu0 0.0
    %107 = vmatprep.subr.mxu0 0.0
    %108 = vmatpush1.msra.mxu0 0.0
    %109 = vmatprep.subr.mxu0 0.0
    %110 = vmatpush1.msra.mxu0 0.0
    %111 = vmatprep.subr.mxu0 0.0
    %112 = vmatpush1.msra.mxu0 0.0
    %113 = vmatprep.subr.mxu0 0.0
    %114 = vmatpush1.msra.mxu0 0.0
    %115 = vmatprep.subr.mxu0 0.0
    %116 = vmatpush1.msra.mxu0 0.0
    %117 = vmatprep.subr.mxu0 0.0
    %118 = vmatpush1.msra.mxu0 0.0
    %119 = vmatprep.subr.mxu0 0.0
    %120 = vmatpush1.msra.mxu0 0.0
    %121 = vmatprep.subr.mxu0 0.0
    %122 = vmatpush1.msra.mxu0 0.0
    %123 = vmatprep.subr.mxu0 0.0
    %124 = vmatpush1.msra.mxu0 0.0
    %125 = vmatprep.subr.mxu0 0.0
    %126 = vmatpush1.msra.mxu0 0.0
    %127 = vmatprep.subr.mxu0 0.0
    %128 = vmatpush1.msra.mxu0 0.0
    %129 = vmatprep.subr.mxu0 0.0
    %130 = vmatpush1.msra.mxu0 0.0
    %131 = vmatprep.subr.mxu0 0.0
    %132 = vmatpush1.msra.mxu0 0.0
    %133 = vmatprep.subr.mxu0 0.0
    %134 = vmatpush1.msra.mxu0 0.0
    %135 = vmatprep.subr.mxu0 0.0
    %136 = vmatpush1.msra.mxu0 0.0
    %137 = vmatprep.subr.mxu0 0.0
    %138 = vmatpush1.msra.mxu0 0.0
    %139 = vmatprep.subr.mxu0 0.0
    %140 = vmatpush1.msra.mxu0 0.0
    %141 = vmatprep.subr.mxu0 0.0
    %142 = vmatpush1.msra.mxu0 0.0
    %143 = vmatprep.subr.mxu0 0.0
    %144 = vmatpush1.msra.mxu0 0.0
    %145 = vmatprep.mubr.f32.mxu0 0.0
    %146 = vmatmul.mubr.f32.gmra.mrb[0].mxu0 %v79
    %v147 = vpop.f32.mrb[0].mxu0
    %v148 = vadd.f32 %v75, %v147
    %v149 = vpop.f32.mrb[0].mxu0
    %150 = vdwg.mxu0
    %v151 = vxor.u32 %v148, 2147483648
    %v152 = vmul.f32 %v151, 1.442695
    %v153 = vpow.pop %v152
    %v154 = vadd.f32 %v153, 1.0
    %v155 = vrcp.pop %v154
    %v156 = vmul.f32 1.0, %v155
    %vm157 = vcmask 64512
    %v159 = vsel %vm157, %v156, 0
    %161 = vmatprep.subr.mxu0 0.0
    %162 = vmatpush1.msra.mxu0 %v38
    %163 = vmatprep.subr.mxu0 0.0
    %164 = vmatpush1.msra.mxu0 0.0
    %165 = vmatprep.subr.mxu0 0.0
    %166 = vmatpush1.msra.mxu0 0.0
    %167 = vmatprep.subr.mxu0 0.0
    %168 = vmatpush1.msra.mxu0 0.0
    %169 = vmatprep.subr.mxu0 0.0
    %170 = vmatpush1.msra.mxu0 0.0
    %171 = vmatprep.subr.mxu0 0.0
    %172 = vmatpush1.msra.mxu0 0.0
    %173 = vmatprep.subr.mxu0 0.0
    %174 = vmatpush1.msra.mxu0 0.0
    %175 = vmatprep.subr.mxu0 0.0
    %176 = vmatpush1.msra.mxu0 0.0
    %177 = vmatprep.subr.mxu0 0.0
    %178 = vmatpush1.msra.mxu0 0.0
    %179 = vmatprep.subr.mxu0 0.0
    %180 = vmatpush1.msra.mxu0 0.0
    %181 = vmatprep.subr.mxu0 0.0
    %182 = vmatpush1.msra.mxu0 0.0
    %183 = vmatprep.subr.mxu0 0.0
    %184 = vmatpush1.msra.mxu0 0.0
    %185 = vmatprep.subr.mxu0 0.0
    %186 = vmatpush1.msra.mxu0 0.0
    %187 = vmatprep.subr.mxu0 0.0
    %188 = vmatpush1.msra.mxu0 0.0
    %189 = vmatprep.subr.mxu0 0.0
    %190 = vmatpush1.msra.mxu0 0.0
    %191 = vmatprep.subr.mxu0 0.0
    %192 = vmatpush1.msra.mxu0 0.0
    %193 = vmatprep.subr.mxu0 0.0
    %194 = vmatpush1.msra.mxu0 0.0
    %195 = vmatprep.subr.mxu0 0.0
    %196 = vmatpush1.msra.mxu0 0.0
    %197 = vmatprep.subr.mxu0 0.0
    %198 = vmatpush1.msra.mxu0 0.0
    %199 = vmatprep.subr.mxu0 0.0
    %200 = vmatpush1.msra.mxu0 0.0
    %201 = vmatprep.subr.mxu0 0.0
    %202 = vmatpush1.msra.mxu0 0.0
    %203 = vmatprep.subr.mxu0 0.0
    %204 = vmatpush1.msra.mxu0 0.0
    %205 = vmatprep.subr.mxu0 0.0
    %206 = vmatpush1.msra.mxu0 0.0
    %207 = vmatprep.subr.mxu0 0.0
    %208 = vmatpush1.msra.mxu0 0.0
    %209 = vmatprep.subr.mxu0 0.0
    %210 = vmatpush1.msra.mxu0 0.0
    %211 = vmatprep.subr.mxu0 0.0
    %212 = vmatpush1.msra.mxu0 0.0
    %213 = vmatprep.subr.mxu0 0.0
    %214 = vmatpush1.msra.mxu0 0.0
    %215 = vmatprep.subr.mxu0 0.0
    %216 = vmatpush1.msra.mxu0 0.0
    %217 = vmatprep.subr.mxu0 0.0
    %218 = vmatpush1.msra.mxu0 0.0
    %219 = vmatprep.subr.mxu0 0.0
    %220 = vmatpush1.msra.mxu0 0.0
    %221 = vmatprep.subr.mxu0 0.0
    %222 = vmatpush1.msra.mxu0 0.0
    %223 = vmatprep.subr.mxu0 0.0
    %224 = vmatpush1.msra.mxu0 0.0
    %225 = vmatprep.mubr.f32.mxu0 0.0
    %226 = vmatmul.mubr.f32.gmra.mrb[0].mxu0 %v159
    %v227 = vpop.f32.mrb[0].mxu0
    %v228 = vadd.f32 0.0, %v227
    %v229 = vpop.f32.mrb[0].mxu0
    %230 = vdwg.mxu0
    %v231 = vmul.f32 %v37, %v228
    %232 = vmax.xlane.f32.xlu0 %v231
    %v233 = vpop.xlane.xlu0 %232
    %v234 = vsub.f32 %v231, %v233
    %v235 = vmul.f32 %v234, 1.442695
    %v236 = vpow.pop %v235
    %237 = vmatprep.subr.mxu0 0.0
    %238 = vmatpush1.msra.mxu0 %v39
    %239 = vmatprep.subr.mxu0 0.0
    %240 = vmatpush1.msra.mxu0 %v40
    %241 = vmatprep.subr.mxu0 0.0
    %242 = vmatpush1.msra.mxu0 %v41
    %243 = vmatprep.subr.mxu0 0.0
    %244 = vmatpush1.msra.mxu0 %v42
    %245 = vmatprep.subr.mxu0 0.0
    %246 = vmatpush1.msra.mxu0 %v43
    %247 = vmatprep.subr.mxu0 0.0
    %248 = vmatpush1.msra.mxu0 %v44
    %249 = vmatprep.subr.mxu0 0.0
    %250 = vmatpush1.msra.mxu0 %v45
    %251 = vmatprep.subr.mxu0 0.0
    %252 = vmatpush1.msra.mxu0 %v46
    %253 = vmatprep.subr.mxu0 0.0
    %254 = vmatpush1.msra.mxu0 %v47
    %255 = vmatprep.subr.mxu0 0.0
    %256 = vmatpush1.msra.mxu0 %v48
    %257 = vmatprep.subr.mxu0 0.0
    %258 = vmatpush1.msra.mxu0 %v49
    %259 = vmatprep.subr.mxu0 0.0
    %260 = vmatpush1.msra.mxu0 %v50
    %261 = vmatprep.subr.mxu0 0.0
    %262 = vmatpush1.msra.mxu0 %v51
    %263 = vmatprep.subr.mxu0 0.0
    %264 = vmatpush1.msra.mxu0 %v52
    %265 = vmatprep.subr.mxu0 0.0
    %266 = vmatpush1.msra.mxu0 %v53
    %267 = vmatprep.subr.mxu0 0.0
    %268 = vmatpush1.msra.mxu0 %v54
    %269 = vmatprep.subr.mxu0 0.0
    %270 = vmatpush1.msra.mxu0 0.0
    %271 = vmatprep.subr.mxu0 0.0
    %272 = vmatpush1.msra.mxu0 0.0
    %273 = vmatprep.subr.mxu0 0.0
    %274 = vmatpush1.msra.mxu0 0.0
    %275 = vmatprep.subr.mxu0 0.0
    %276 = vmatpush1.msra.mxu0 0.0
    %277 = vmatprep.subr.mxu0 0.0
    %278 = vmatpush1.msra.mxu0 0.0
    %279 = vmatprep.subr.mxu0 0.0
    %280 = vmatpush1.msra.mxu0 0.0
    %281 = vmatprep.subr.mxu0 0.0
    %282 = vmatpush1.msra.mxu0 0.0
    %283 = vmatprep.subr.mxu0 0.0
    %284 = vmatpush1.msra.mxu0 0.0
    %285 = vmatprep.subr.mxu0 0.0
    %286 = vmatpush1.msra.mxu0 0.0
    %287 = vmatprep.subr.mxu0 0.0
    %288 = vmatpush1.msra.mxu0 0.0
    %289 = vmatprep.subr.mxu0 0.0
    %290 = vmatpush1.msra.mxu0 0.0
    %291 = vmatprep.subr.mxu0 0.0
    %292 = vmatpush1.msra.mxu0 0.0
    %293 = vmatprep.subr.mxu0 0.0
    %294 = vmatpush1.msra.mxu0 0.0
    %295 = vmatprep.subr.mxu0 0.0
    %296 = vmatpush1.msra.mxu0 0.0
    %297 = vmatprep.subr.mxu0 0.0
    %298 = vmatpush1.msra.mxu0 0.0
    %299 = vmatprep.subr.mxu0 0.0
    %300 = vmatpush1.msra.mxu0 0.0
    %301 = vmatprep.mubr.f32.mxu0 0.0
    %302 = vmatmul.mubr.f32.gmra.mrb[0].mxu0 %v236
    %v303 = vpop.f32.mrb[0].mxu0
    %v304 = vadd.f32 0.0, %v303
    %v305 = vpop.f32.mrb[0].mxu0
    %306 = vdwg.mxu0
    %v307 = vmul.f32 %v304, 8.0
    %v308 = vrcp.pop %v307
    %v309 = vmul.f32 1.0, %v308
    %v311 = vsel %vm157, %v309, 0
    %313 = vmatprep.subr.mxu0 0.0
    %314 = vmatpush1.msra.mxu0 %v38
    %315 = vmatprep.subr.mxu0 0.0
    %316 = vmatpush1.msra.mxu0 0.0
    %317 = vmatprep.subr.mxu0 0.0
    %318 = vmatpush1.msra.mxu0 0.0
    %319 = vmatprep.subr.mxu0 0.0
    %320 = vmatpush1.msra.mxu0 0.0
    %321 = vmatprep.subr.mxu0 0.0
    %322 = vmatpush1.msra.mxu0 0.0
    %323 = vmatprep.subr.mxu0 0.0
    %324 = vmatpush1.msra.mxu0 0.0
    %325 = vmatprep.subr.mxu0 0.0
    %326 = vmatpush1.msra.mxu0 0.0
    %327 = vmatprep.subr.mxu0 0.0
    %328 = vmatpush1.msra.mxu0 0.0
    %329 = vmatprep.subr.mxu0 0.0
    %330 = vmatpush1.msra.mxu0 0.0
    %331 = vmatprep.subr.mxu0 0.0
    %332 = vmatpush1.msra.mxu0 0.0
    %333 = vmatprep.subr.mxu0 0.0
    %334 = vmatpush1.msra.mxu0 0.0
    %335 = vmatprep.subr.mxu0 0.0
    %336 = vmatpush1.msra.mxu0 0.0
    %337 = vmatprep.subr.mxu0 0.0
    %338 = vmatpush1.msra.mxu0 0.0
    %339 = vmatprep.subr.mxu0 0.0
    %340 = vmatpush1.msra.mxu0 0.0
    %341 = vmatprep.subr.mxu0 0.0
    %342 = vmatpush1.msra.mxu0 0.0
    %343 = vmatprep.subr.mxu0 0.0
    %344 = vmatpush1.msra.mxu0 0.0
    %345 = vmatprep.subr.mxu0 0.0
    %346 = vmatpush1.msra.mxu0 0.0
    %347 = vmatprep.subr.mxu0 0.0
    %348 = vmatpush1.msra.mxu0 0.0
    %349 = vmatprep.subr.mxu0 0.0
    %350 = vmatpush1.msra.mxu0 0.0
    %351 = vmatprep.subr.mxu0 0.0
    %352 = vmatpush1.msra.mxu0 0.0
    %353 = vmatprep.subr.mxu0 0.0
    %354 = vmatpush1.msra.mxu0 0.0
    %355 = vmatprep.subr.mxu0 0.0
    %356 = vmatpush1.msra.mxu0 0.0
    %357 = vmatprep.subr.mxu0 0.0
    %358 = vmatpush1.msra.mxu0 0.0
    %359 = vmatprep.subr.mxu0 0.0
    %360 = vmatpush1.msra.mxu0 0.0
    %361 = vmatprep.subr.mxu0 0.0
    %362 = vmatpush1.msra.mxu0 0.0
    %363 = vmatprep.subr.mxu0 0.0
    %364 = vmatpush1.msra.mxu0 0.0
    %365 = vmatprep.subr.mxu0 0.0
    %366 = vmatpush1.msra.mxu0 0.0
    %367 = vmatprep.subr.mxu0 0.0
    %368 = vmatpush1.msra.mxu0 0.0
    %369 = vmatprep.subr.mxu0 0.0
    %370 = vmatpush1.msra.mxu0 0.0
    %371 = vmatprep.subr.mxu0 0.0
    %372 = vmatpush1.msra.mxu0 0.0
    %373 = vmatprep.subr.mxu0 0.0
    %374 = vmatpush1.msra.mxu0 0.0
    %375 = vmatprep.subr.mxu0 0.0
    %376 = vmatpush1.msra.mxu0 0.0
    %377 = vmatprep.mubr.f32.mxu0 0.0
    %378 = vmatmul.mubr.f32.gmra.mrb[0].mxu0 %v311
    %v379 = vpop.f32.mrb[0].mxu0
    %v380 = vadd.f32 0.0, %v379
    %v381 = vpop.f32.mrb[0].mxu0
    %382 = vdwg.mxu0
    %v383 = vmul.f32 %v236, %v380
    %384 = vmatprep.subr.mxu0 0.0
    %385 = vmatpush1.msra.mxu0 %v55
    %386 = vmatprep.subr.mxu0 0.0
    %387 = vmatpush1.msra.mxu0 %v56
    %388 = vmatprep.subr.mxu0 0.0
    %389 = vmatpush1.msra.mxu0 %v57
    %390 = vmatprep.subr.mxu0 0.0
    %391 = vmatpush1.msra.mxu0 %v58
    %392 = vmatprep.subr.mxu0 0.0
    %393 = vmatpush1.msra.mxu0 %v59
    %394 = vmatprep.subr.mxu0 0.0
    %395 = vmatpush1.msra.mxu0 %v60
    %396 = vmatprep.subr.mxu0 0.0
    %397 = vmatpush1.msra.mxu0 %v61
    %398 = vmatprep.subr.mxu0 0.0
    %399 = vmatpush1.msra.mxu0 %v62
    %400 = vmatprep.subr.mxu0 0.0
    %401 = vmatpush1.msra.mxu0 %v63
    %402 = vmatprep.subr.mxu0 0.0
    %403 = vmatpush1.msra.mxu0 %v64
    %404 = vmatprep.subr.mxu0 0.0
    %405 = vmatpush1.msra.mxu0 %v65
    %406 = vmatprep.subr.mxu0 0.0
    %407 = vmatpush1.msra.mxu0 %v66
    %408 = vmatprep.subr.mxu0 0.0
    %409 = vmatpush1.msra.mxu0 %v67
    %410 = vmatprep.subr.mxu0 0.0
    %411 = vmatpush1.msra.mxu0 %v68
    %412 = vmatprep.subr.mxu0 0.0
    %413 = vmatpush1.msra.mxu0 %v69
    %414 = vmatprep.subr.mxu0 0.0
    %415 = vmatpush1.msra.mxu0 %v70
    %416 = vmatprep.subr.mxu0 0.0
    %417 = vmatpush1.msra.mxu0 0.0
    %418 = vmatprep.subr.mxu0 0.0
    %419 = vmatpush1.msra.mxu0 0.0
    %420 = vmatprep.subr.mxu0 0.0
    %421 = vmatpush1.msra.mxu0 0.0
    %422 = vmatprep.subr.mxu0 0.0
    %423 = vmatpush1.msra.mxu0 0.0
    %424 = vmatprep.subr.mxu0 0.0
    %425 = vmatpush1.msra.mxu0 0.0
    %426 = vmatprep.subr.mxu0 0.0
    %427 = vmatpush1.msra.mxu0 0.0
    %428 = vmatprep.subr.mxu0 0.0
    %429 = vmatpush1.msra.mxu0 0.0
    %430 = vmatprep.subr.mxu0 0.0
    %431 = vmatpush1.msra.mxu0 0.0
    %432 = vmatprep.subr.mxu0 0.0
    %433 = vmatpush1.msra.mxu0 0.0
    %434 = vmatprep.subr.mxu0 0.0
    %435 = vmatpush1.msra.mxu0 0.0
    %436 = vmatprep.subr.mxu0 0.0
    %437 = vmatpush1.msra.mxu0 0.0
    %438 = vmatprep.subr.mxu0 0.0
    %439 = vmatpush1.msra.mxu0 0.0
    %440 = vmatprep.subr.mxu0 0.0
    %441 = vmatpush1.msra.mxu0 0.0
    %442 = vmatprep.subr.mxu0 0.0
    %443 = vmatpush1.msra.mxu0 0.0
    %444 = vmatprep.subr.mxu0 0.0
    %445 = vmatpush1.msra.mxu0 0.0
    %446 = vmatprep.subr.mxu0 0.0
    %447 = vmatpush1.msra.mxu0 0.0
    %448 = vmatprep.mubr.f32.mxu0 0.0
    %449 = vmatmul.mubr.f32.gmra.mrb[0].mxu0 %v383
    %v450 = vpop.f32.mrb[0].mxu0
    %v451 = vadd.f32 0.0, %v450
    %v452 = vpop.f32.mrb[0].mxu0
    %453 = vdwg.mxu0
    %454 = vst.msk [vmem:[#allocation2] sm:$0xff] %vm157, %v148
    %455 = vst.msk [vmem:[#allocation4] sm:$0xff] %vm157, %v156
    %vm456 = vcmask 130048
    %457 = vst.msk [vmem:[#allocation6] sm:$0xff] %vm456, %v451
    // Predicated region
    $region30: #{tpu_custom_call.1} parent=1 // pred_check
      _
    $region31: #{tpu_custom_call.1} parent=1 // pred_check_branch
      %459 = sbr.rel (0) target = $region33
    $region32: #{tpu_custom_call.1} parent=1 // pred_region
      %s461 = ssub.s32 128, 128
      %462 = vsyncadd [#allocation3], %s461
      %s464 = sshll.u32 [#allocation2], 4
      %s465 = int_to_ptr.vmem [resolvable:$true] %s464
      %467 = dma.vmem_to_hbm [thread:$0]  %s465, 128, %s7, [#allocation3]
    $region33: #{tpu_custom_call.1} parent=1 // pred_fallthru
      _
    // Predicated region
    $region34: #{tpu_custom_call.1} parent=1 // pred_check
      _
    $region35: #{tpu_custom_call.1} parent=1 // pred_check_branch
      %469 = sbr.rel (0) target = $region37
    $region36: #{tpu_custom_call.1} parent=1 // pred_region
      %s471 = ssub.s32 128, 128
      %472 = vsyncadd [#allocation5], %s471
      %s474 = sshll.u32 [#allocation4], 4
      %s475 = int_to_ptr.vmem [resolvable:$true] %s474
      %477 = dma.vmem_to_hbm [thread:$0]  %s475, 128, %s8, [#allocation5]
    $region37: #{tpu_custom_call.1} parent=1 // pred_fallthru
      _
    // Predicated region
    $region38: #{tpu_custom_call.1} parent=1 // pred_check
      _
    $region39: #{tpu_custom_call.1} parent=1 // pred_check_branch
      %479 = sbr.rel (0) target = $region41
    $region40: #{tpu_custom_call.1} parent=1 // pred_region
      %s481 = ssub.s32 128, 128
      %482 = vsyncadd [#allocation5], %s481
      %s484 = sshll.u32 [#allocation6], 4
      %s485 = int_to_ptr.vmem [resolvable:$true] %s484
      %487 = dma.vmem_to_hbm [thread:$0]  %s485, 128, %s9, [#allocation5]
    $region41: #{tpu_custom_call.1} parent=1 // pred_fallthru
      _
    // Predicated region
    $region42: #{tpu_custom_call.1} parent=1 // pred_check
      _
    $region43: #{tpu_custom_call.1} parent=1 // pred_check_branch
      %489 = sbr.rel (0) target = $region45
    $region44: #{tpu_custom_call.1} parent=1 // pred_region
      %490 = dma.done [#allocation3], 128
    $region45: #{tpu_custom_call.1} parent=1 // pred_fallthru
      _
    // Predicated region
    $region46: #{tpu_custom_call.1} parent=1 // pred_check
      _
    $region47: #{tpu_custom_call.1} parent=1 // pred_check_branch
      %492 = sbr.rel (0) target = $region49
    $region48: #{tpu_custom_call.1} parent=1 // pred_region
      %493 = dma.done [#allocation5], 128
    $region49: #{tpu_custom_call.1} parent=1 // pred_fallthru
      _
    // Predicated region
    $region50: #{tpu_custom_call.1} parent=1 // pred_check
      _
    $region51: #{tpu_custom_call.1} parent=1 // pred_check_branch
      %495 = sbr.rel (0) target = $region53
    $region52: #{tpu_custom_call.1} parent=1 // pred_region
      %496 = dma.done [#allocation5], 128
    $region53: #{tpu_custom_call.1} parent=1 // pred_fallthru
      _
    %497 = vsyncpa [#allocation3], 1
    %498 = vsyncpa [#allocation5], 1

</llo_original>
